<compile_context>
chip_gen: v7x
topology: tpu7x:2x2x1
jax: 0.10.0
libtpu: 0.0.40
codegen_flags: <defaults>
</compile_context>

<pallas_src>
import functools

import jax
import jax.numpy as jnp
from jax.experimental import pallas as pl
from jax.experimental.pallas import tpu as pltpu


# --------------------------------------------------------------------------------------
# Kernels
# --------------------------------------------------------------------------------------

def _squeeze_excite(m, wa_ref, b1_ref, wb_ref, b2_ref, use_mxu):
    """m: (Nb, C) f32 channel means -> s: (Nb, C) f32 sigmoid gate."""
    if use_mxu:
        # wa = w1.T (C, Cr), wb = w2 (Cr, C): two tiny MXU passes, MXU is otherwise idle.
        h = jnp.dot(m, wa_ref[...].astype(jnp.float32),
                    preferred_element_type=jnp.float32)
        h = jnp.maximum(h + b1_ref[...], 0.0)
        s = jnp.dot(h, wb_ref[...].astype(jnp.float32),
                    preferred_element_type=jnp.float32)
    else:
        # wa = w1 (Cr, C), wb = w2.T (C, Cr): VPU/XLU mul + last-axis reduce (tiny C).
        h = jnp.sum(m[:, None, :] * wa_ref[...][None, :, :], axis=2)
        h = jnp.maximum(h + b1_ref[...], 0.0)
        s = jnp.sum(h[:, None, :] * wb_ref[...][None, :, :], axis=2)
    return jax.nn.sigmoid(s + b2_ref[...])


def _channel_attention_kernel(x_ref, wa_ref, b1_ref, wb_ref, b2_ref, o_ref, *,
                              inv_hw, use_mxu):
    """Single-pass path: one (Nb, C, HW_pad) slab per grid step."""
    x = x_ref[...]                                              # native dtype slab
    # Mean over true HW (pad lanes are zero), reduced in f32; no persistent f32 slab.
    m = jnp.sum(x.astype(jnp.float32), axis=2) * inv_hw         # (Nb, C)
    s = _squeeze_excite(m, wa_ref, b1_ref, wb_ref, b2_ref, use_mxu)
    # Scale at native dtype; HW_pad % 128 == 0 keeps this store lane-dense.
    o_ref[...] = x * s.astype(x.dtype)[:, :, None]


def _pool_scale_kernel(x_ref, wa_ref, b1_ref, wb_ref, b2_ref, s_ref, acc_ref, *,
                       hw_total, hw_block, inv_hw, use_mxu):
    """Two-phase path, phase 1: accumulate channel sums over HW tiles, emit gate s."""
    k = pl.program_id(1)

    @pl.when(k == 0)
    def _():
        acc_ref[...] = jnp.zeros_like(acc_ref)

    x = x_ref[...].astype(jnp.float32)                          # (1, C, hw_t)
    # Mask ragged / padded HW lanes so they never pollute the channel sums.
    lane = jax.lax.broadcasted_iota(jnp.int32, x.shape, 2) + k * hw_block
    acc_ref[...] += jnp.sum(jnp.where(lane < hw_total, x, 0.0), axis=2)   # (1, C)

    @pl.when(k == pl.num_programs(1) - 1)
    def _():
        m = acc_ref[...] * inv_hw                               # (1, C)
        s = _squeeze_excite(m, wa_ref, b1_ref, wb_ref, b2_ref, use_mxu)
        s_ref[...] = s[:, :, None].astype(s_ref.dtype)          # (1, C, 1)


def _scale_kernel(x_ref, s_ref, o_ref):
    """Two-phase path, phase 2: HW-tiled x * s broadcast multiply."""
    x = x_ref[...]                                              # (1, C, hw_t)
    o_ref[...] = x * s_ref[...].astype(x.dtype)                 # s: (1, C, 1)


# --------------------------------------------------------------------------------------
# Hardware queries / tiling policy
# --------------------------------------------------------------------------------------

def _tpu_vmem_capacity_bytes():
    try:
        info = pltpu.get_tpu_info()
        for attr in ("vmem_capacity_bytes", "vmem_bytes", "vmem_size_bytes"):
            v = getattr(info, attr, None)
            if v:
                return int(v)
    except Exception:
        pass
    return 64 << 20  # conservative default (v7x per-core VMEM)


def _tpu_num_tensorcores():
    getters = (
        lambda: getattr(pltpu.get_tpu_info(), "num_cores", None),
        lambda: getattr(pltpu.get_tpu_info(), "tensorcores_per_chip", None),
        lambda: getattr(jax.devices()[0], "num_cores", None),
    )
    for g in getters:
        try:
            v = g()
            if v:
                return int(v)
        except Exception:
            pass
    return 1  # v5e/v6e-style single TensorCore policy (always correct)


def _choose_batch_block(n, per_n_bytes, num_cores, target_bytes, min_bytes=1 << 20):
    """Batch rows per grid step. Free choice; grid uses cdiv with a masked ragged tail."""
    per_n_bytes = max(per_n_bytes, 1)
    nb_max = max(1, min(n, target_bytes // per_n_bytes))
    if num_cores <= 1 or n <= 1 or nb_max == 1:
        # Single-TC chips (v5e/v6e): biggest slab under the target; extra grid steps
        # only add ~0.35us/step overhead with no parallelism payback.
        return nb_max
    nb_min = max(1, min(nb_max, min_bytes // per_n_bytes))
    cdiv = lambda a, b: -(-a // b)
    # Megacore (v7x): prefer an even, balanced step count (ideally >= 2 steps/core)
    # while keeping each slab above ~min_bytes.
    for want_steps in (2 * num_cores, 2):
        cand = cdiv(n, want_steps)
        if nb_min <= cand <= nb_max and cdiv(n, cand) % 2 == 0:
            return cand
    return nb_max


# --------------------------------------------------------------------------------------
# Wrapper
# --------------------------------------------------------------------------------------

def channel_attention(x, w1, b1, w2, b2, *, target_block_bytes=4 << 20,
                      force_two_phase=False, _two_phase_hw_block=None):
    """x: [N, C, H, W] (NCHW, like PyTorch). Returns [N, C, H, W]."""
    N, C, H, W = x.shape
    HW = H * W
    Cr = w1.shape[0]
    itemsize = jnp.dtype(x.dtype).itemsize

    # Lane-dense last dim: pad HW up to a multiple of 128 (zeros) so stores are unmasked.
    HW_pad = -(-HW // 128) * 128
    x_flat = x.reshape(N, C, HW)
    if HW_pad != HW:
        x_flat = jnp.pad(x_flat, ((0, 0), (0, 0), (0, HW_pad - HW)))
    inv_hw = 1.0 / float(HW)

    # Weight orientation chosen once in the wrapper (no in-kernel transposes).
    use_mxu = (C >= 128 and Cr >= 8)
    if use_mxu:
        wa, wb = w1.T, w2                      # (C, Cr), (Cr, C) for jnp.dot on the MXU
    else:
        wa, wb = w1, w2.T                      # (Cr, C), (C, Cr) for VPU mul + reduce
    b1_row = b1.reshape(1, Cr).astype(jnp.float32)
    b2_row = b2.reshape(1, C).astype(jnp.float32)
    param_bytes = int((wa.size + wb.size + b1_row.size + b2_row.size) * 4)

    vmem_cap = max(int(0.7 * _tpu_vmem_capacity_bytes()), 16 << 20)  # ~30% headroom
    num_cores = _tpu_num_tensorcores()

    per_n_in = C * HW_pad * itemsize
    # Estimated single-pass VMEM need at nb=1 (double-buffered in+out, f32 reduce temps).
    per_n_need = 4 * per_n_in + 2 * C * HW_pad * 4 + param_bytes + (2 << 20)
    two_phase = force_two_phase or (per_n_need > vmem_cap)

    if not two_phase:
        # ---------------- single-pass path ----------------
        nb = _choose_batch_block(N, per_n_in, num_cores, target_block_bytes)
        grid = (pl.cdiv(N, nb),)
        block_bytes = nb * per_n_in
        vmem_limit = int(min(max(4 * block_bytes + 2 * nb * C * HW_pad * 4
                                 + param_bytes + (2 << 20), 16 << 20), vmem_cap))
        kernel = functools.partial(_channel_attention_kernel,
                                   inv_hw=inv_hw, use_mxu=use_mxu)
        out_flat = pl.pallas_call(
            kernel,
            out_shape=jax.ShapeDtypeStruct((N, C, HW_pad), x.dtype),
            grid_spec=pltpu.PrefetchScalarGridSpec(
                num_scalar_prefetch=0,
                grid=grid,
                in_specs=[
                    pl.BlockSpec((nb, C, HW_pad), lambda n: (n, 0, 0)),
                    pl.BlockSpec(wa.shape, lambda n: (0, 0)),
                    pl.BlockSpec((1, Cr), lambda n: (0, 0)),
                    pl.BlockSpec(wb.shape, lambda n: (0, 0)),
                    pl.BlockSpec((1, C), lambda n: (0, 0)),
                ],
                out_specs=pl.BlockSpec((nb, C, HW_pad), lambda n: (n, 0, 0)),
            ),
            compiler_params=pltpu.CompilerParams(
                dimension_semantics=("parallel",),
                vmem_limit_bytes=vmem_limit,
            ),
        )(x_flat, wa, b1_row, wb, b2_row)
    else:
        # ---------------- two-phase HW-tiled path (huge feature maps / v7x VMEM) ------
        if _two_phase_hw_block is not None:
            hw_t = int(_two_phase_hw_block)
        else:
            hw_t = (target_block_bytes // max(C * itemsize, 1)) // 128 * 128
            hw_t = max(128, min(hw_t, HW_pad))
        hw_steps = pl.cdiv(HW_pad, hw_t)
        blk_in = C * hw_t * itemsize
        blk_f32 = C * hw_t * 4
        vmem_p1 = int(min(max(2 * blk_in + 2 * blk_f32 + param_bytes + (4 << 20),
                              16 << 20), vmem_cap))
        vmem_p2 = int(min(max(4 * blk_in + (4 << 20), 16 << 20), vmem_cap))

        pool_kernel = functools.partial(_pool_scale_kernel, hw_total=HW, hw_block=hw_t,
                                        inv_hw=inv_hw, use_mxu=use_mxu)
        # Phase 1: per-channel sums accumulated over the 'arbitrary' HW axis -> gate s.
        s = pl.pallas_call(
            pool_kernel,
            out_shape=jax.ShapeDtypeStruct((N, C, 1), jnp.float32),
            grid_spec=pltpu.PrefetchScalarGridSpec(
                num_scalar_prefetch=0,
                grid=(N, hw_steps),
                in_specs=[
                    pl.BlockSpec((1, C, hw_t), lambda n, k: (n, 0, k)),
                    pl.BlockSpec(wa.shape, lambda n, k: (0, 0)),
                    pl.BlockSpec((1, Cr), lambda n, k: (0, 0)),
                    pl.BlockSpec(wb.shape, lambda n, k: (0, 0)),
                    pl.BlockSpec((1, C), lambda n, k: (0, 0)),
                ],
                out_specs=pl.BlockSpec((1, C, 1), lambda n, k: (n, 0, 0)),
                scratch_shapes=[pltpu.VMEM((1, C), jnp.float32)],
            ),
            compiler_params=pltpu.CompilerParams(
                dimension_semantics=("parallel", "arbitrary"),
                vmem_limit_bytes=vmem_p1,
            ),
        )(x_flat, wa, b1_row, wb, b2_row)

        # Phase 2: HW-tiled x * s broadcast multiply (pure HBM streaming).
        out_flat = pl.pallas_call(
            _scale_kernel,
            out_shape=jax.ShapeDtypeStruct((N, C, HW_pad), x.dtype),
            grid_spec=pltpu.PrefetchScalarGridSpec(
                num_scalar_prefetch=0,
                grid=(N, hw_steps),
                in_specs=[
                    pl.BlockSpec((1, C, hw_t), lambda n, k: (n, 0, k)),
                    pl.BlockSpec((1, C, 1), lambda n, k: (n, 0, 0)),
                ],
                out_specs=pl.BlockSpec((1, C, hw_t), lambda n, k: (n, 0, k)),
            ),
            compiler_params=pltpu.CompilerParams(
                dimension_semantics=("parallel", "parallel"),
                vmem_limit_bytes=vmem_p2,
            ),
        )(x_flat, s)

    if HW_pad != HW:
        out_flat = out_flat[:, :, :HW]
    return out_flat.reshape(N, C, H, W)


def channel_attention_ref(x, w1, b1, w2, b2):
    """Pure-JAX reference matching the PyTorch forward."""
    m = jnp.mean(x, axis=(2, 3))                               # (N, C)
    h = jnp.maximum(m @ w1.T + b1, 0.0)                        # (N, Cr)
    s = jax.nn.sigmoid(h @ w2 + b2)                            # (N, C)  ConvTranspose 1x1
    return x * s[:, :, None, None]


# --------------------------------------------------------------------------------------
# Demo / correctness checks
# --------------------------------------------------------------------------------------

if __name__ == "__main__":
    key = jax.random.PRNGKey(0)

    def make_inputs(k, N, C, Cr, H, W, dtype=jnp.float32):
        kx, k1, k2, k3, k4 = jax.random.split(k, 5)
        x = jax.random.normal(kx, (N, C, H, W), dtype=jnp.float32).astype(dtype)
        w1 = jax.random.normal(k1, (Cr, C), dtype=jnp.float32) * 0.1   # Conv2d (Cr,C,1,1)
        b1 = jax.random.normal(k2, (Cr,), dtype=jnp.float32) * 0.1
        w2 = jax.random.normal(k3, (Cr, C), dtype=jnp.float32) * 0.1   # ConvT (Cr,C,1,1)
        b2 = jax.random.normal(k4, (C,), dtype=jnp.float32) * 0.1
        return x, w1, b1, w2, b2

    k0, k1, k2, k3, k4, k5 = jax.random.split(key, 6)

    # Main demo: num_filters=16, reduction_ratio=8 (Cr=2), 16x16 spatial (lane-dense).
    x, w1, b1, w2, b2 = make_inputs(k0, N=2, C=16, Cr=2, H=16, W=16)
    out = jax.block_until_ready(channel_attention(x, w1, b1, w2, b2))
    ref = channel_attention_ref(x, w1, b1, w2, b2)
    assert out.shape == (2, 16, 16, 16)
    assert jnp.allclose(out, ref, atol=1e-5, rtol=1e-5), "single-pass mismatch"

    # HW not a multiple of 128 (14x14=196): exercises the lane-padding path.
    xp, w1p, b1p, w2p, b2p = make_inputs(k1, N=2, C=16, Cr=2, H=14, W=14)
    outp = jax.block_until_ready(channel_attention(xp, w1p, b1p, w2p, b2p))
    refp = channel_attention_ref(xp, w1p, b1p, w2p, b2p)
    assert jnp.allclose(outp, refp, atol=1e-5, rtol=1e-5), "padded-HW mismatch"

    # Ragged batch tail (N=3, small target -> nb=2, cdiv grid with masked last block).
    xr, w1r, b1r, w2r, b2r = make_inputs(k2, N=3, C=16, Cr=2, H=16, W=16)
    outr = jax.block_until_ready(
        channel_attention(xr, w1r, b1r, w2r, b2r, target_block_bytes=32 << 10))
    refr = channel_attention_ref(xr, w1r, b1r, w2r, b2r)
    assert jnp.allclose(outr, refr, atol=1e-5, rtol=1e-5), "ragged-batch mismatch"

    # MXU squeeze/excite path at production-style channel count (C=128, Cr=16).
    xm, w1m, b1m, w2m, b2m = make_inputs(k3, N=2, C=128, Cr=16, H=8, W=8)
    outm = jax.block_until_ready(channel_attention(xm, w1m, b1m, w2m, b2m))
    refm = channel_attention_ref(xm, w1m, b1m, w2m, b2m)
    assert jnp.allclose(outm, refm, atol=1e-4, rtol=1e-4), "MXU-path mismatch"

    # Two-phase HW-tiled path (forced at small shapes to exercise both kernels).
    out2 = jax.block_until_ready(
        channel_attention(x, w1, b1, w2, b2, force_two_phase=True,
                          _two_phase_hw_block=128))
    assert jnp.allclose(out2, ref, atol=1e-5, rtol=1e-5), "two-phase mismatch"

    # bf16 input: native-dtype scale/store path.
    xb = x.astype(jnp.bfloat16)
    outb = jax.block_until_ready(channel_attention(xb, w1, b1, w2, b2))
    refb = channel_attention_ref(xb.astype(jnp.float32), w1, b1, w2, b2)
    assert outb.dtype == jnp.bfloat16
    assert jnp.allclose(outb.astype(jnp.float32), refb, atol=5e-2, rtol=5e-2), "bf16 mismatch"

    print("KERNEL_OK")
</pallas_src>

<mosaic_0001>
module attributes {stable_mosaic.version = 11 : i64} {
  func.func @_channel_attention_kernel(%arg0: i32, %arg1: memref<2x16x256xf32, #tpu.memory_space<vmem>>, %arg2: memref<2x16xf32, #tpu.memory_space<vmem>>, %arg3: memref<1x2xf32, #tpu.memory_space<vmem>>, %arg4: memref<16x2xf32, #tpu.memory_space<vmem>>, %arg5: memref<1x16xf32, #tpu.memory_space<vmem>>, %arg6: memref<2x16x256xf32, #tpu.memory_space<vmem>>) attributes {dimension_semantics = [#tpu.dimension_semantics<parallel>], iteration_bounds = array<i64: 1>, scalar_prefetch = 0 : i64, scratch_operands = 0 : i64, tpu.core_type = #tpu.core_type<tc>, window_params = [{transform_indices = @transform_0, window_bounds = array<i64: 2, 16, 256>}, {pipeline_mode = #tpu.pipeline_mode<synchronous>, transform_indices = @transform_1, window_bounds = array<i64: 2, 16>}, {pipeline_mode = #tpu.pipeline_mode<synchronous>, transform_indices = @transform_2, window_bounds = array<i64: 1, 2>}, {pipeline_mode = #tpu.pipeline_mode<synchronous>, transform_indices = @transform_3, window_bounds = array<i64: 16, 2>}, {pipeline_mode = #tpu.pipeline_mode<synchronous>, transform_indices = @transform_4, window_bounds = array<i64: 1, 16>}, {transform_indices = @transform_5, window_bounds = array<i64: 2, 16, 256>}]} {
    %c0 = arith.constant 0 : index
    %c0_0 = arith.constant 0 : index
    %c0_1 = arith.constant 0 : index
    %0 = vector.load %arg1[%c0, %c0_0, %c0_1] : memref<2x16x256xf32, #tpu.memory_space<vmem>>, vector<2x16x256xf32>
    %cst = arith.constant dense<0.000000e+00> : vector<2x16xf32>
    %1 = vector.multi_reduction <add>, %0, %cst [2] : vector<2x16x256xf32> to vector<2x16xf32>
    %cst_2 = arith.constant 3.906250e-03 : f32
    %2 = vector.broadcast %cst_2 : f32 to vector<2x16xf32>
    %3 = arith.mulf %1, %2 : vector<2x16xf32>
    %4 = vector.shape_cast %3 : vector<2x16xf32> to vector<2x1x16xf32>
    %c0_3 = arith.constant 0 : index
    %c0_4 = arith.constant 0 : index
    %5 = vector.load %arg2[%c0_3, %c0_4] : memref<2x16xf32, #tpu.memory_space<vmem>>, vector<2x16xf32>
    %6 = vector.shape_cast %5 : vector<2x16xf32> to vector<1x2x16xf32>
    %7 = vector.broadcast %4 : vector<2x1x16xf32> to vector<2x2x16xf32>
    %8 = vector.broadcast %6 : vector<1x2x16xf32> to vector<2x2x16xf32>
    %9 = arith.mulf %7, %8 : vector<2x2x16xf32>
    %cst_5 = arith.constant dense<0.000000e+00> : vector<2x2xf32>
    %10 = vector.multi_reduction <add>, %9, %cst_5 [2] : vector<2x2x16xf32> to vector<2x2xf32>
    %c0_6 = arith.constant 0 : index
    %c0_7 = arith.constant 0 : index
    %11 = vector.load %arg3[%c0_6, %c0_7] : memref<1x2xf32, #tpu.memory_space<vmem>>, vector<1x2xf32>
    %12 = vector.broadcast %11 : vector<1x2xf32> to vector<2x2xf32>
    %13 = arith.addf %10, %12 : vector<2x2xf32>
    %cst_8 = arith.constant 0.000000e+00 : f32
    %14 = vector.broadcast %cst_8 : f32 to vector<2x2xf32>
    %15 = arith.maximumf %13, %14 : vector<2x2xf32>
    %16 = vector.shape_cast %15 : vector<2x2xf32> to vector<2x1x2xf32>
    %c0_9 = arith.constant 0 : index
    %c0_10 = arith.constant 0 : index
    %17 = vector.load %arg4[%c0_9, %c0_10] : memref<16x2xf32, #tpu.memory_space<vmem>>, vector<16x2xf32>
    %18 = vector.shape_cast %17 : vector<16x2xf32> to vector<1x16x2xf32>
    %19 = vector.broadcast %16 : vector<2x1x2xf32> to vector<2x16x2xf32>
    %20 = vector.broadcast %18 : vector<1x16x2xf32> to vector<2x16x2xf32>
    %21 = arith.mulf %19, %20 : vector<2x16x2xf32>
    %cst_11 = arith.constant dense<0.000000e+00> : vector<2x16xf32>
    %22 = vector.multi_reduction <add>, %21, %cst_11 [2] : vector<2x16x2xf32> to vector<2x16xf32>
    %c0_12 = arith.constant 0 : index
    %c0_13 = arith.constant 0 : index
    %23 = vector.load %arg5[%c0_12, %c0_13] : memref<1x16xf32, #tpu.memory_space<vmem>>, vector<1x16xf32>
    %24 = vector.broadcast %23 : vector<1x16xf32> to vector<2x16xf32>
    %25 = arith.addf %22, %24 : vector<2x16xf32>
    %26 = arith.negf %25 : vector<2x16xf32>
    %27 = math.exp %26 : vector<2x16xf32>
    %cst_14 = arith.constant 1.000000e+00 : f32
    %28 = vector.broadcast %cst_14 : f32 to vector<2x16xf32>
    %29 = arith.addf %28, %27 : vector<2x16xf32>
    %30 = arith.divf %28, %29 : vector<2x16xf32>
    %31 = vector.shape_cast %30 : vector<2x16xf32> to vector<2x16x1xf32>
    %32 = vector.broadcast %31 : vector<2x16x1xf32> to vector<2x16x256xf32>
    %33 = arith.mulf %0, %32 : vector<2x16x256xf32>
    %c0_15 = arith.constant 0 : index
    %c0_16 = arith.constant 0 : index
    %c0_17 = arith.constant 0 : index
    %34 = vector.load %arg6[%c0_15, %c0_16, %c0_17] : memref<2x16x256xf32, #tpu.memory_space<vmem>>, vector<2x16x256xf32>
    tpu.vector_store %arg6[%c0_15, %c0_16, %c0_17], %33 {strides = array<i32>} : memref<2x16x256xf32, #tpu.memory_space<vmem>>, vector<2x16x256xf32>,
    return
  }
  func.func @transform_0(%arg0: i32) -> (i32, i32, i32) {
    %c0_i32 = arith.constant 0 : i32
    %c0_i32_0 = arith.constant 0 : i32
    %c0_i32_1 = arith.constant 0 : i32
    return %arg0, %c0_i32, %c0_i32_0 : i32, i32, i32
  }
  func.func @transform_1(%arg0: i32) -> (i32, i32) {
    %c0_i32 = arith.constant 0 : i32
    %c0_i32_0 = arith.constant 0 : i32
    %c0_i32_1 = arith.constant 0 : i32
    return %c0_i32, %c0_i32_0 : i32, i32
  }
  func.func @transform_2(%arg0: i32) -> (i32, i32) {
    %c0_i32 = arith.constant 0 : i32
    %c0_i32_0 = arith.constant 0 : i32
    %c0_i32_1 = arith.constant 0 : i32
    return %c0_i32, %c0_i32_0 : i32, i32
  }
  func.func @transform_3(%arg0: i32) -> (i32, i32) {
    %c0_i32 = arith.constant 0 : i32
    %c0_i32_0 = arith.constant 0 : i32
    %c0_i32_1 = arith.constant 0 : i32
    return %c0_i32, %c0_i32_0 : i32, i32
  }
  func.func @transform_4(%arg0: i32) -> (i32, i32) {
    %c0_i32 = arith.constant 0 : i32
    %c0_i32_0 = arith.constant 0 : i32
    %c0_i32_1 = arith.constant 0 : i32
    return %c0_i32, %c0_i32_0 : i32, i32
  }
  func.func @transform_5(%arg0: i32) -> (i32, i32, i32) {
    %c0_i32 = arith.constant 0 : i32
    %c0_i32_0 = arith.constant 0 : i32
    %c0_i32_1 = arith.constant 0 : i32
    return %arg0, %c0_i32, %c0_i32_0 : i32, i32, i32
  }
}

</mosaic_0001>

<llo_original>
// kernel: tpu_custom_call.1
$region0: #{tpu_custom_call.1}
  #allocation0 [shape = 'u32[]', space=smem, size = 0x4, offset = 0x4, fixed_abs, tag = 'smem constant byte address 0x4 - core index']
  #allocation1 [shape = 'u32[144,128]{1,0:T(1,128)}', space=vmem, size = 0x12000, scoped, tag = 'internal scratch']
  %s0 = inlined_call_operand.hbm [shape: f32[2,16,256], index: 0, kind: input, shape index: {}]
  %s1 = inlined_call_operand.vmem [shape: f32[2,16], index: 1, kind: input, shape index: {}]
  %s2 = inlined_call_operand.vmem [shape: f32[1,2], index: 2, kind: input, shape index: {}]
  %s3 = inlined_call_operand.vmem [shape: f32[16,2], index: 3, kind: input, shape index: {}]
  %s4 = inlined_call_operand.vmem [shape: f32[1,16], index: 4, kind: input, shape index: {}]
  %s5 = inlined_call_operand.hbm [shape: f32[2,16,256], index: 5, kind: output, shape index: {}]
  %s6 = sld [smem:[#allocation0]]
  $region34: #{tpu_custom_call.1} parent=0
    _
  %s8 = ssub.s32 1, %s6
  %s9 = scalar_select 0, %s8, %s6
  $region1: #{tpu_custom_call.1} parent=0
    #allocation2 [shape = 'u8[32768]{0}', space=vmem, size = 0x8000, scoped, tag = 'input window, operand 0, single buffered']
    #allocation3 [shape = 's32[1]{0}', space=sflag, size = 0x4, scoped, tag = 'scoped memory for tpu_custom_call.1']
    #allocation4 [shape = 's32[1]{0}', space=sflag, size = 0x4, scoped, tag = 'scoped memory for tpu_custom_call.1']
    #allocation5 [shape = 'u8[32768]{0}', space=vmem, size = 0x8000, scoped, tag = 'output window, operand 0, single buffered']
    %10 = vsyncpa [#allocation3], 0
    %11 = vsyncpa [#allocation4], 0
    // Predicated region
    $region2: #{tpu_custom_call.1} parent=1 // pred_check
      _
    $region3: #{tpu_custom_call.1} parent=1 // pred_check_branch
      %13 = sbr.rel (0) target = $region5
    $region4: #{tpu_custom_call.1} parent=1 // pred_region
      %s15 = ssub.s32 1024, 1024
      %16 = vsyncadd [#allocation3], %s15
      %s17 = sshll.u32 [#allocation2], 4
      %s18 = int_to_ptr.vmem [resolvable:$true] %s17
      %23 = dma.hbm_to_vmem [thread:$0]  %s0, 1024, %s18, [#allocation3], 256, 256, 16
    $region5: #{tpu_custom_call.1} parent=1 // pred_fallthru
      _
    // Predicated region
    $region6: #{tpu_custom_call.1} parent=1 // pred_check
      _
    $region7: #{tpu_custom_call.1} parent=1 // pred_check_branch
      %25 = sbr.rel (0) target = $region9
    $region8: #{tpu_custom_call.1} parent=1 // pred_region
      _
    $region9: #{tpu_custom_call.1} parent=1 // pred_fallthru
      _
    // Predicated region
    $region10: #{tpu_custom_call.1} parent=1 // pred_check
      _
    $region11: #{tpu_custom_call.1} parent=1 // pred_check_branch
      %27 = sbr.rel (0) target = $region13
    $region12: #{tpu_custom_call.1} parent=1 // pred_region
      _
    $region13: #{tpu_custom_call.1} parent=1 // pred_fallthru
      _
    // Predicated region
    $region14: #{tpu_custom_call.1} parent=1 // pred_check
      _
    $region15: #{tpu_custom_call.1} parent=1 // pred_check_branch
      %29 = sbr.rel (0) target = $region17
    $region16: #{tpu_custom_call.1} parent=1 // pred_region
      _
    $region17: #{tpu_custom_call.1} parent=1 // pred_fallthru
      _
    // Predicated region
    $region18: #{tpu_custom_call.1} parent=1 // pred_check
      _
    $region19: #{tpu_custom_call.1} parent=1 // pred_check_branch
      %31 = sbr.rel (0) target = $region21
    $region20: #{tpu_custom_call.1} parent=1 // pred_region
      _
    $region21: #{tpu_custom_call.1} parent=1 // pred_fallthru
      _
    // Predicated region
    $region22: #{tpu_custom_call.1} parent=1 // pred_check
      _
    $region23: #{tpu_custom_call.1} parent=1 // pred_check_branch
      %33 = sbr.rel (0) target = $region25
    $region24: #{tpu_custom_call.1} parent=1 // pred_region
      %34 = dma.done [#allocation3], 1024
    $region25: #{tpu_custom_call.1} parent=1 // pred_fallthru
      _
    %v35 = vld [vmem:[#allocation2] sm:$0xff]
    %v36 = vld [vmem:[#allocation2 + $0x8] sm:$0xff]
    %v37 = vld [vmem:[#allocation2 + $0x10] sm:$0xff]
    %v38 = vld [vmem:[#allocation2 + $0x18] sm:$0xff]
    %v39 = vld [vmem:[#allocation2 + $0x20] sm:$0xff]
    %v40 = vld [vmem:[#allocation2 + $0x28] sm:$0xff]
    %v41 = vld [vmem:[#allocation2 + $0x30] sm:$0xff]
    %v42 = vld [vmem:[#allocation2 + $0x38] sm:$0xff]
    %v43 = vadd.f32 %v35, %v36
    %44 = vadd.xlane.f32.xlu0 %v43
    %v45 = vpop.xlane.xlu0 %44
    %v46 = vadd.f32 %v37, %v38
    %47 = vadd.xlane.f32.xlu0 %v46
    %v48 = vpop.xlane.xlu0 %47
    %v49 = vadd.f32 %v39, %v40
    %50 = vadd.xlane.f32.xlu0 %v49
    %v51 = vpop.xlane.xlu0 %50
    %v52 = vadd.f32 %v41, %v42
    %53 = vadd.xlane.f32.xlu0 %v52
    %v54 = vpop.xlane.xlu0 %53
    %v55 = vmul.f32 %v45, 0.00390625
    %v56 = vmul.f32 %v48, 0.00390625
    %v57 = vmul.f32 %v51, 0.00390625
    %v58 = vmul.f32 %v54, 0.00390625
    %v59 = vld [vmem:[%s1] sm:$0x3]
    %v61 = vlaneseq
    %v62 = vshrl.u32 %v61, 7
    %v63 = vsub.s32 0, %v62
    %v64 = vrot.slane %v59, %v63
    %66 = vbcast.lane.b32.xlu0 %v64, 256
    %v67 = vpop.permute.xlu0 %66
    %s69 = sor.u32 256, 8
    %70 = vbcast.lane.b32.xlu0 %v64, %s69
    %v71 = vpop.permute.xlu0 %70
    %v72 = vlaneseq
    %v73 = vshrl.u32 %v72, 7
    %v74 = vsub.s32 1, %v73
    %v75 = vrot.slane %v59, %v74
    %77 = vbcast.lane.b32.xlu0 %v75, 256
    %v78 = vpop.permute.xlu0 %77
    %s80 = sor.u32 256, 8
    %81 = vbcast.lane.b32.xlu0 %v75, %s80
    %v82 = vpop.permute.xlu0 %81
    %v87 = vmul.f32 %v55, %v67
    %v88 = vmul.f32 %v56, %v71
    %v89 = vmul.f32 %v55, %v78
    %v90 = vmul.f32 %v56, %v82
    %v91 = vmul.f32 %v57, %v67
    %v92 = vmul.f32 %v58, %v71
    %v93 = vmul.f32 %v57, %v78
    %v94 = vmul.f32 %v58, %v82
    %103 = vset.pattern.permute.xlu0 0
    %104 = vperm.xlu0 %103, %v87
    %v105 = vpop.permute.xlu0 %104
    %106 = vset.pattern.permute.xlu0 0
    %107 = vperm.xlu0 %106, %v88
    %v108 = vpop.permute.xlu0 %107
    %109 = vset.pattern.permute.xlu0 0
    %110 = vperm.xlu0 %109, %v89
    %v111 = vpop.permute.xlu0 %110
    %112 = vset.pattern.permute.xlu0 0
    %113 = vperm.xlu0 %112, %v90
    %v114 = vpop.permute.xlu0 %113
    %115 = vset.pattern.permute.xlu0 0
    %116 = vperm.xlu0 %115, %v91
    %v117 = vpop.permute.xlu0 %116
    %118 = vset.pattern.permute.xlu0 0
    %119 = vperm.xlu0 %118, %v92
    %v120 = vpop.permute.xlu0 %119
    %121 = vset.pattern.permute.xlu0 0
    %122 = vperm.xlu0 %121, %v93
    %v123 = vpop.permute.xlu0 %122
    %124 = vset.pattern.permute.xlu0 0
    %125 = vperm.xlu0 %124, %v94
    %v126 = vpop.permute.xlu0 %125
    %v127 = vlaneseq
    %v128 = vand.u32 %v127, 127
    %v129 = vlaneseq
    %v130 = vshrl.u32 %v129, 7
    %v131 = vsub.s32 %v128, %v130
    %v132 = vrot.slane %v105, %v131
    %v133 = vadd.s32 %v128, 4294967288
    %v134 = vlaneseq
    %v135 = vshrl.u32 %v134, 7
    %v136 = vsub.s32 %v133, %v135
    %v137 = vrot.slane %v108, %v136
    %vm138 = vcmask 130112
    %v139 = vsel %vm138, %v137, %v132
    %v140 = vlaneseq
    %v141 = vshrl.u32 %v140, 7
    %v142 = vsub.s32 %v128, %v141
    %v143 = vrot.slane %v111, %v142
    %v144 = vlaneseq
    %v145 = vshrl.u32 %v144, 7
    %v146 = vsub.s32 %v133, %v145
    %v147 = vrot.slane %v114, %v146
    %v148 = vsel %vm138, %v147, %v143
    %v149 = vlaneseq
    %v150 = vshrl.u32 %v149, 7
    %v151 = vsub.s32 %v128, %v150
    %v152 = vrot.slane %v117, %v151
    %v153 = vlaneseq
    %v154 = vshrl.u32 %v153, 7
    %v155 = vsub.s32 %v133, %v154
    %v156 = vrot.slane %v120, %v155
    %v157 = vsel %vm138, %v156, %v152
    %v158 = vlaneseq
    %v159 = vshrl.u32 %v158, 7
    %v160 = vsub.s32 %v128, %v159
    %v161 = vrot.slane %v123, %v160
    %v162 = vlaneseq
    %v163 = vshrl.u32 %v162, 7
    %v164 = vsub.s32 %v133, %v163
    %v165 = vrot.slane %v126, %v164
    %v166 = vsel %vm138, %v165, %v161
    %vm167 = vcmask 1041409
    %v168 = vsel %vm167, %v148, %v139
    %v169 = vsel %vm167, %v166, %v157
    %vm172 = vcmask 123904
    %v173 = vsel %vm172, %v168, 0.0
    %174 = vadd.xlane.f32.xlu0 %v173
    %v175 = vpop.xlane.xlu0 %174
    %v176 = vsel %vm172, %v169, 0.0
    %177 = vadd.xlane.f32.xlu0 %v176
    %v178 = vpop.xlane.xlu0 %177
    %v179 = vld [vmem:[%s2] sm:$0x1]
    %v181 = vlaneseq
    %v182 = vshrl.u32 %v181, 7
    %v183 = vsub.s32 0, %v182
    %v184 = vrot.slane %v179, %v183
    %186 = vbcast.lane.b32.xlu0 %v184, 256
    %v187 = vpop.permute.xlu0 %186
    %v189 = vadd.f32 %v175, %v187
    %v190 = vadd.f32 %v178, %v187
    %v191 = vmax.f32 %v189, 0.0
    %v192 = vmax.f32 %v190, 0.0
    %v193 = vld [vmem:[%s3] sm:$0xff]
    %v194 = vld [vmem:[%s3 + $0x8] sm:$0xff]
    %v197 = vlaneseq
    %v198 = vshrl.u32 %v197, 7
    %v199 = vsub.s32 0, %v198
    %v200 = vrot.slane %v193, %v199
    %202 = vbcast.lane.b32.xlu0 %v200, 256
    %v203 = vpop.permute.xlu0 %202
    %v204 = vlaneseq
    %v205 = vshrl.u32 %v204, 7
    %v206 = vsub.s32 1, %v205
    %v207 = vrot.slane %v193, %v206
    %209 = vbcast.lane.b32.xlu0 %v207, 256
    %v210 = vpop.permute.xlu0 %209
    %v211 = vlaneseq
    %v212 = vshrl.u32 %v211, 7
    %v213 = vsub.s32 2, %v212
    %v214 = vrot.slane %v193, %v213
    %216 = vbcast.lane.b32.xlu0 %v214, 256
    %v217 = vpop.permute.xlu0 %216
    %v218 = vlaneseq
    %v219 = vshrl.u32 %v218, 7
    %v220 = vsub.s32 3, %v219
    %v221 = vrot.slane %v193, %v220
    %223 = vbcast.lane.b32.xlu0 %v221, 256
    %v224 = vpop.permute.xlu0 %223
    %v225 = vlaneseq
    %v226 = vshrl.u32 %v225, 7
    %v227 = vsub.s32 4, %v226
    %v228 = vrot.slane %v193, %v227
    %230 = vbcast.lane.b32.xlu0 %v228, 256
    %v231 = vpop.permute.xlu0 %230
    %v232 = vlaneseq
    %v233 = vshrl.u32 %v232, 7
    %v234 = vsub.s32 5, %v233
    %v235 = vrot.slane %v193, %v234
    %237 = vbcast.lane.b32.xlu0 %v235, 256
    %v238 = vpop.permute.xlu0 %237
    %v239 = vlaneseq
    %v240 = vshrl.u32 %v239, 7
    %v241 = vsub.s32 6, %v240
    %v242 = vrot.slane %v193, %v241
    %244 = vbcast.lane.b32.xlu0 %v242, 256
    %v245 = vpop.permute.xlu0 %244
    %v246 = vlaneseq
    %v247 = vshrl.u32 %v246, 7
    %v248 = vsub.s32 7, %v247
    %v249 = vrot.slane %v193, %v248
    %251 = vbcast.lane.b32.xlu0 %v249, 256
    %v252 = vpop.permute.xlu0 %251
    %v253 = vlaneseq
    %v254 = vshrl.u32 %v253, 7
    %v255 = vsub.s32 0, %v254
    %v256 = vrot.slane %v194, %v255
    %258 = vbcast.lane.b32.xlu0 %v256, 256
    %v259 = vpop.permute.xlu0 %258
    %v260 = vlaneseq
    %v261 = vshrl.u32 %v260, 7
    %v262 = vsub.s32 1, %v261
    %v263 = vrot.slane %v194, %v262
    %265 = vbcast.lane.b32.xlu0 %v263, 256
    %v266 = vpop.permute.xlu0 %265
    %v267 = vlaneseq
    %v268 = vshrl.u32 %v267, 7
    %v269 = vsub.s32 2, %v268
    %v270 = vrot.slane %v194, %v269
    %272 = vbcast.lane.b32.xlu0 %v270, 256
    %v273 = vpop.permute.xlu0 %272
    %v274 = vlaneseq
    %v275 = vshrl.u32 %v274, 7
    %v276 = vsub.s32 3, %v275
    %v277 = vrot.slane %v194, %v276
    %279 = vbcast.lane.b32.xlu0 %v277, 256
    %v280 = vpop.permute.xlu0 %279
    %v281 = vlaneseq
    %v282 = vshrl.u32 %v281, 7
    %v283 = vsub.s32 4, %v282
    %v284 = vrot.slane %v194, %v283
    %286 = vbcast.lane.b32.xlu0 %v284, 256
    %v287 = vpop.permute.xlu0 %286
    %v288 = vlaneseq
    %v289 = vshrl.u32 %v288, 7
    %v290 = vsub.s32 5, %v289
    %v291 = vrot.slane %v194, %v290
    %293 = vbcast.lane.b32.xlu0 %v291, 256
    %v294 = vpop.permute.xlu0 %293
    %v295 = vlaneseq
    %v296 = vshrl.u32 %v295, 7
    %v297 = vsub.s32 6, %v296
    %v298 = vrot.slane %v194, %v297
    %300 = vbcast.lane.b32.xlu0 %v298, 256
    %v301 = vpop.permute.xlu0 %300
    %v302 = vlaneseq
    %v303 = vshrl.u32 %v302, 7
    %v304 = vsub.s32 7, %v303
    %v305 = vrot.slane %v194, %v304
    %307 = vbcast.lane.b32.xlu0 %v305, 256
    %v308 = vpop.permute.xlu0 %307
    %v325 = vmul.f32 %v191, %v203
    %v326 = vmul.f32 %v191, %v210
    %v327 = vmul.f32 %v191, %v217
    %v328 = vmul.f32 %v191, %v224
    %v329 = vmul.f32 %v191, %v231
    %v330 = vmul.f32 %v191, %v238
    %v331 = vmul.f32 %v191, %v245
    %v332 = vmul.f32 %v191, %v252
    %v333 = vmul.f32 %v191, %v259
    %v334 = vmul.f32 %v191, %v266
    %v335 = vmul.f32 %v191, %v273
    %v336 = vmul.f32 %v191, %v280
    %v337 = vmul.f32 %v191, %v287
    %v338 = vmul.f32 %v191, %v294
    %v339 = vmul.f32 %v191, %v301
    %v340 = vmul.f32 %v191, %v308
    %v341 = vmul.f32 %v192, %v203
    %v342 = vmul.f32 %v192, %v210
    %v343 = vmul.f32 %v192, %v217
    %v344 = vmul.f32 %v192, %v224
    %v345 = vmul.f32 %v192, %v231
    %v346 = vmul.f32 %v192, %v238
    %v347 = vmul.f32 %v192, %v245
    %v348 = vmul.f32 %v192, %v252
    %v349 = vmul.f32 %v192, %v259
    %v350 = vmul.f32 %v192, %v266
    %v351 = vmul.f32 %v192, %v273
    %v352 = vmul.f32 %v192, %v280
    %v353 = vmul.f32 %v192, %v287
    %v354 = vmul.f32 %v192, %v294
    %v355 = vmul.f32 %v192, %v301
    %v356 = vmul.f32 %v192, %v308
    %389 = vset.pattern.permute.xlu0 0
    %390 = vperm.xlu0 %389, %v325
    %v391 = vpop.permute.xlu0 %390
    %392 = vset.pattern.permute.xlu0 0
    %393 = vperm.xlu0 %392, %v326
    %v394 = vpop.permute.xlu0 %393
    %395 = vset.pattern.permute.xlu0 0
    %396 = vperm.xlu0 %395, %v327
    %v397 = vpop.permute.xlu0 %396
    %398 = vset.pattern.permute.xlu0 0
    %399 = vperm.xlu0 %398, %v328
    %v400 = vpop.permute.xlu0 %399
    %401 = vset.pattern.permute.xlu0 0
    %402 = vperm.xlu0 %401, %v329
    %v403 = vpop.permute.xlu0 %402
    %404 = vset.pattern.permute.xlu0 0
    %405 = vperm.xlu0 %404, %v330
    %v406 = vpop.permute.xlu0 %405
    %407 = vset.pattern.permute.xlu0 0
    %408 = vperm.xlu0 %407, %v331
    %v409 = vpop.permute.xlu0 %408
    %410 = vset.pattern.permute.xlu0 0
    %411 = vperm.xlu0 %410, %v332
    %v412 = vpop.permute.xlu0 %411
    %413 = vset.pattern.permute.xlu0 0
    %414 = vperm.xlu0 %413, %v333
    %v415 = vpop.permute.xlu0 %414
    %416 = vset.pattern.permute.xlu0 0
    %417 = vperm.xlu0 %416, %v334
    %v418 = vpop.permute.xlu0 %417
    %419 = vset.pattern.permute.xlu0 0
    %420 = vperm.xlu0 %419, %v335
    %v421 = vpop.permute.xlu0 %420
    %422 = vset.pattern.permute.xlu0 0
    %423 = vperm.xlu0 %422, %v336
    %v424 = vpop.permute.xlu0 %423
    %425 = vset.pattern.permute.xlu0 0
    %426 = vperm.xlu0 %425, %v337
    %v427 = vpop.permute.xlu0 %426
    %428 = vset.pattern.permute.xlu0 0
    %429 = vperm.xlu0 %428, %v338
    %v430 = vpop.permute.xlu0 %429
    %431 = vset.pattern.permute.xlu0 0
    %432 = vperm.xlu0 %431, %v339
    %v433 = vpop.permute.xlu0 %432
    %434 = vset.pattern.permute.xlu0 0
    %435 = vperm.xlu0 %434, %v340
    %v436 = vpop.permute.xlu0 %435
    %437 = vset.pattern.permute.xlu0 0
    %438 = vperm.xlu0 %437, %v341
    %v439 = vpop.permute.xlu0 %438
    %440 = vset.pattern.permute.xlu0 0
    %441 = vperm.xlu0 %440, %v342
    %v442 = vpop.permute.xlu0 %441
    %443 = vset.pattern.permute.xlu0 0
    %444 = vperm.xlu0 %443, %v343
    %v445 = vpop.permute.xlu0 %444
    %446 = vset.pattern.permute.xlu0 0
    %447 = vperm.xlu0 %446, %v344
    %v448 = vpop.permute.xlu0 %447
    %449 = vset.pattern.permute.xlu0 0
    %450 = vperm.xlu0 %449, %v345
    %v451 = vpop.permute.xlu0 %450
    %452 = vset.pattern.permute.xlu0 0
    %453 = vperm.xlu0 %452, %v346
    %v454 = vpop.permute.xlu0 %453
    %455 = vset.pattern.permute.xlu0 0
    %456 = vperm.xlu0 %455, %v347
    %v457 = vpop.permute.xlu0 %456
    %458 = vset.pattern.permute.xlu0 0
    %459 = vperm.xlu0 %458, %v348
    %v460 = vpop.permute.xlu0 %459
    %461 = vset.pattern.permute.xlu0 0
    %462 = vperm.xlu0 %461, %v349
    %v463 = vpop.permute.xlu0 %462
    %464 = vset.pattern.permute.xlu0 0
    %465 = vperm.xlu0 %464, %v350
    %v466 = vpop.permute.xlu0 %465
    %467 = vset.pattern.permute.xlu0 0
    %468 = vperm.xlu0 %467, %v351
    %v469 = vpop.permute.xlu0 %468
    %470 = vset.pattern.permute.xlu0 0
    %471 = vperm.xlu0 %470, %v352
    %v472 = vpop.permute.xlu0 %471
    %473 = vset.pattern.permute.xlu0 0
    %474 = vperm.xlu0 %473, %v353
    %v475 = vpop.permute.xlu0 %474
    %476 = vset.pattern.permute.xlu0 0
    %477 = vperm.xlu0 %476, %v354
    %v478 = vpop.permute.xlu0 %477
    %479 = vset.pattern.permute.xlu0 0
    %480 = vperm.xlu0 %479, %v355
    %v481 = vpop.permute.xlu0 %480
    %482 = vset.pattern.permute.xlu0 0
    %483 = vperm.xlu0 %482, %v356
    %v484 = vpop.permute.xlu0 %483
    %v485 = vlaneseq
    %v486 = vshrl.u32 %v485, 7
    %v487 = vsub.s32 %v128, %v486
    %v488 = vrot.slane %v391, %v487
    %v489 = vlaneseq
    %v490 = vshrl.u32 %v489, 7
    %v491 = vsub.s32 %v128, %v490
    %v492 = vrot.slane %v394, %v491
    %v493 = vlaneseq
    %v494 = vshrl.u32 %v493, 7
    %v495 = vsub.s32 %v128, %v494
    %v496 = vrot.slane %v397, %v495
    %v497 = vlaneseq
    %v498 = vshrl.u32 %v497, 7
    %v499 = vsub.s32 %v128, %v498
    %v500 = vrot.slane %v400, %v499
    %v501 = vlaneseq
    %v502 = vshrl.u32 %v501, 7
    %v503 = vsub.s32 %v128, %v502
    %v504 = vrot.slane %v403, %v503
    %v505 = vlaneseq
    %v506 = vshrl.u32 %v505, 7
    %v507 = vsub.s32 %v128, %v506
    %v508 = vrot.slane %v406, %v507
    %v509 = vlaneseq
    %v510 = vshrl.u32 %v509, 7
    %v511 = vsub.s32 %v128, %v510
    %v512 = vrot.slane %v409, %v511
    %v513 = vlaneseq
    %v514 = vshrl.u32 %v513, 7
    %v515 = vsub.s32 %v128, %v514
    %v516 = vrot.slane %v412, %v515
    %v517 = vlaneseq
    %v518 = vshrl.u32 %v517, 7
    %v519 = vsub.s32 %v128, %v518
    %v520 = vrot.slane %v415, %v519
    %v521 = vlaneseq
    %v522 = vshrl.u32 %v521, 7
    %v523 = vsub.s32 %v128, %v522
    %v524 = vrot.slane %v418, %v523
    %v525 = vlaneseq
    %v526 = vshrl.u32 %v525, 7
    %v527 = vsub.s32 %v128, %v526
    %v528 = vrot.slane %v421, %v527
    %v529 = vlaneseq
    %v530 = vshrl.u32 %v529, 7
    %v531 = vsub.s32 %v128, %v530
    %v532 = vrot.slane %v424, %v531
    %v533 = vlaneseq
    %v534 = vshrl.u32 %v533, 7
    %v535 = vsub.s32 %v128, %v534
    %v536 = vrot.slane %v427, %v535
    %v537 = vlaneseq
    %v538 = vshrl.u32 %v537, 7
    %v539 = vsub.s32 %v128, %v538
    %v540 = vrot.slane %v430, %v539
    %v541 = vlaneseq
    %v542 = vshrl.u32 %v541, 7
    %v543 = vsub.s32 %v128, %v542
    %v544 = vrot.slane %v433, %v543
    %v545 = vlaneseq
    %v546 = vshrl.u32 %v545, 7
    %v547 = vsub.s32 %v128, %v546
    %v548 = vrot.slane %v436, %v547
    %v549 = vlaneseq
    %v550 = vshrl.u32 %v549, 7
    %v551 = vsub.s32 %v128, %v550
    %v552 = vrot.slane %v439, %v551
    %v553 = vlaneseq
    %v554 = vshrl.u32 %v553, 7
    %v555 = vsub.s32 %v128, %v554
    %v556 = vrot.slane %v442, %v555
    %v557 = vlaneseq
    %v558 = vshrl.u32 %v557, 7
    %v559 = vsub.s32 %v128, %v558
    %v560 = vrot.slane %v445, %v559
    %v561 = vlaneseq
    %v562 = vshrl.u32 %v561, 7
    %v563 = vsub.s32 %v128, %v562
    %v564 = vrot.slane %v448, %v563
    %v565 = vlaneseq
    %v566 = vshrl.u32 %v565, 7
    %v567 = vsub.s32 %v128, %v566
    %v568 = vrot.slane %v451, %v567
    %v569 = vlaneseq
    %v570 = vshrl.u32 %v569, 7
    %v571 = vsub.s32 %v128, %v570
    %v572 = vrot.slane %v454, %v571
    %v573 = vlaneseq
    %v574 = vshrl.u32 %v573, 7
    %v575 = vsub.s32 %v128, %v574
    %v576 = vrot.slane %v457, %v575
    %v577 = vlaneseq
    %v578 = vshrl.u32 %v577, 7
    %v579 = vsub.s32 %v128, %v578
    %v580 = vrot.slane %v460, %v579
    %v581 = vlaneseq
    %v582 = vshrl.u32 %v581, 7
    %v583 = vsub.s32 %v128, %v582
    %v584 = vrot.slane %v463, %v583
    %v585 = vlaneseq
    %v586 = vshrl.u32 %v585, 7
    %v587 = vsub.s32 %v128, %v586
    %v588 = vrot.slane %v466, %v587
    %v589 = vlaneseq
    %v590 = vshrl.u32 %v589, 7
    %v591 = vsub.s32 %v128, %v590
    %v592 = vrot.slane %v469, %v591
    %v593 = vlaneseq
    %v594 = vshrl.u32 %v593, 7
    %v595 = vsub.s32 %v128, %v594
    %v596 = vrot.slane %v472, %v595
    %v597 = vlaneseq
    %v598 = vshrl.u32 %v597, 7
    %v599 = vsub.s32 %v128, %v598
    %v600 = vrot.slane %v475, %v599
    %v601 = vlaneseq
    %v602 = vshrl.u32 %v601, 7
    %v603 = vsub.s32 %v128, %v602
    %v604 = vrot.slane %v478, %v603
    %v605 = vlaneseq
    %v606 = vshrl.u32 %v605, 7
    %v607 = vsub.s32 %v128, %v606
    %v608 = vrot.slane %v481, %v607
    %v609 = vlaneseq
    %v610 = vshrl.u32 %v609, 7
    %v611 = vsub.s32 %v128, %v610
    %v612 = vrot.slane %v484, %v611
    %v613 = vsel %vm167, %v492, %v488
    %vm614 = vcmask 1042434
    %v615 = vsel %vm614, %v496, %v613
    %vm616 = vcmask 1043459
    %v617 = vsel %vm616, %v500, %v615
    %vm618 = vcmask 1044484
    %v619 = vsel %vm618, %v504, %v617
    %vm620 = vcmask 1045509
    %v621 = vsel %vm620, %v508, %v619
    %vm622 = vcmask 1046534
    %v623 = vsel %vm622, %v512, %v621
    %vm624 = vcmask 1047559
    %v625 = vsel %vm624, %v516, %v623
    %v626 = vsel %vm167, %v524, %v520
    %v627 = vsel %vm614, %v528, %v626
    %v628 = vsel %vm616, %v532, %v627
    %v629 = vsel %vm618, %v536, %v628
    %v630 = vsel %vm620, %v540, %v629
    %v631 = vsel %vm622, %v544, %v630
    %v632 = vsel %vm624, %v548, %v631
    %v633 = vsel %vm167, %v556, %v552
    %v634 = vsel %vm614, %v560, %v633
    %v635 = vsel %vm616, %v564, %v634
    %v636 = vsel %vm618, %v568, %v635
    %v637 = vsel %vm620, %v572, %v636
    %v638 = vsel %vm622, %v576, %v637
    %v639 = vsel %vm624, %v580, %v638
    %v640 = vsel %vm167, %v588, %v584
    %v641 = vsel %vm614, %v592, %v640
    %v642 = vsel %vm616, %v596, %v641
    %v643 = vsel %vm618, %v600, %v642
    %v644 = vsel %vm620, %v604, %v643
    %v645 = vsel %vm622, %v608, %v644
    %v646 = vsel %vm624, %v612, %v645
    %vm651 = vcmask 15360
    %v652 = vsel %vm651, %v625, 0.0
    %653 = vadd.xlane.f32.xlu0 %v652
    %v654 = vpop.xlane.xlu0 %653
    %v655 = vsel %vm651, %v632, 0.0
    %656 = vadd.xlane.f32.xlu0 %v655
    %v657 = vpop.xlane.xlu0 %656
    %v658 = vsel %vm651, %v639, 0.0
    %659 = vadd.xlane.f32.xlu0 %v658
    %v660 = vpop.xlane.xlu0 %659
    %v661 = vsel %vm651, %v646, 0.0
    %662 = vadd.xlane.f32.xlu0 %v661
    %v663 = vpop.xlane.xlu0 %662
    %v664 = vld [vmem:[%s4] sm:$0x1]
    %v666 = vlaneseq
    %v667 = vshrl.u32 %v666, 7
    %v668 = vsub.s32 0, %v667
    %v669 = vrot.slane %v664, %v668
    %671 = vbcast.lane.b32.xlu0 %v669, 256
    %v672 = vpop.permute.xlu0 %671
    %s674 = sor.u32 256, 8
    %675 = vbcast.lane.b32.xlu0 %v669, %s674
    %v676 = vpop.permute.xlu0 %675
    %v679 = vadd.f32 %v654, %v672
    %v680 = vadd.f32 %v657, %v676
    %v681 = vadd.f32 %v660, %v672
    %v682 = vadd.f32 %v663, %v676
    %v683 = vxor.u32 %v679, 2147483648
    %v684 = vxor.u32 %v680, 2147483648
    %v685 = vxor.u32 %v681, 2147483648
    %v686 = vxor.u32 %v682, 2147483648
    %v687 = vmul.f32 %v683, 1.442695
    %v688 = vpow.pop %v687
    %v689 = vmul.f32 %v684, 1.442695
    %v690 = vpow.pop %v689
    %v691 = vmul.f32 %v685, 1.442695
    %v692 = vpow.pop %v691
    %v693 = vmul.f32 %v686, 1.442695
    %v694 = vpow.pop %v693
    %v695 = vadd.f32 %v688, 1.0
    %v696 = vadd.f32 %v690, 1.0
    %v697 = vadd.f32 %v692, 1.0
    %v698 = vadd.f32 %v694, 1.0
    %v699 = vrcp.pop %v695
    %v700 = vmul.f32 1.0, %v699
    %v701 = vrcp.pop %v696
    %v702 = vmul.f32 1.0, %v701
    %v703 = vrcp.pop %v697
    %v704 = vmul.f32 1.0, %v703
    %v705 = vrcp.pop %v698
    %v706 = vmul.f32 1.0, %v705
    %708 = vset.pattern.permute.xlu0 0
    %709 = vperm.xlu0 %708, %v700
    %v710 = vpop.permute.xlu0 %709
    %713 = vset.pattern.permute.xlu0 0
    %714 = vperm.xlu0 %713, %v702
    %v715 = vpop.permute.xlu0 %714
    %718 = vset.pattern.permute.xlu0 0
    %719 = vperm.xlu0 %718, %v704
    %v720 = vpop.permute.xlu0 %719
    %723 = vset.pattern.permute.xlu0 0
    %724 = vperm.xlu0 %723, %v706
    %v725 = vpop.permute.xlu0 %724
    %v727 = vmul.f32 %v35, %v710
    %v728 = vmul.f32 %v36, %v710
    %v729 = vmul.f32 %v37, %v715
    %v730 = vmul.f32 %v38, %v715
    %v731 = vmul.f32 %v39, %v720
    %v732 = vmul.f32 %v40, %v720
    %v733 = vmul.f32 %v41, %v725
    %v734 = vmul.f32 %v42, %v725
    %735 = vst [vmem:[#allocation5] sm:$0xff] %v727
    %736 = vst [vmem:[#allocation5 + $0x8] sm:$0xff] %v728
    %737 = vst [vmem:[#allocation5 + $0x10] sm:$0xff] %v729
    %738 = vst [vmem:[#allocation5 + $0x18] sm:$0xff] %v730
    %739 = vst [vmem:[#allocation5 + $0x20] sm:$0xff] %v731
    %740 = vst [vmem:[#allocation5 + $0x28] sm:$0xff] %v732
    %741 = vst [vmem:[#allocation5 + $0x30] sm:$0xff] %v733
    %742 = vst [vmem:[#allocation5 + $0x38] sm:$0xff] %v734
    // Predicated region
    $region26: #{tpu_custom_call.1} parent=1 // pred_check
      _
    $region27: #{tpu_custom_call.1} parent=1 // pred_check_branch
      %744 = sbr.rel (0) target = $region29
    $region28: #{tpu_custom_call.1} parent=1 // pred_region
      %s746 = ssub.s32 1024, 1024
      %747 = vsyncadd [#allocation4], %s746
      %s748 = sshll.u32 [#allocation5], 4
      %s749 = int_to_ptr.vmem [resolvable:$true] %s748
      %754 = dma.vmem_to_hbm [thread:$0]  %s749, 1024, %s5, [#allocation4], 256, 256, 16
    $region29: #{tpu_custom_call.1} parent=1 // pred_fallthru
      _
    // Predicated region
    $region30: #{tpu_custom_call.1} parent=1 // pred_check
      _
    $region31: #{tpu_custom_call.1} parent=1 // pred_check_branch
      %756 = sbr.rel (0) target = $region33
    $region32: #{tpu_custom_call.1} parent=1 // pred_region
      %757 = dma.done [#allocation4], 1024
    $region33: #{tpu_custom_call.1} parent=1 // pred_fallthru
      _
    %758 = vsyncpa [#allocation3], 1
    %759 = vsyncpa [#allocation4], 1

</llo_original>
